<compile_context>
chip_gen: v6e
topology: v6e:2x2x1
jax: 0.10.0
libtpu: 0.0.40
codegen_flags: <defaults>
</compile_context>

<pallas_src>
import functools

import jax
import jax.numpy as jnp
from jax.experimental import pallas as pl
from jax.experimental.pallas import tpu as pltpu


def _round_up(x, m):
    return ((x + m - 1) // m) * m


def _fused_ensemble_kernel(x_ref, w1_ref, b1_ref, w2_ref, b2_ref, o_ref, *, inv_m):
    """Single fused ensemble MLP step.

    x_ref  : (tb, I)
    w1_ref : (I, M*H)    concatenated first-layer weights
    b1_ref : (1, M*H)    concatenated first-layer biases
    w2_ref : (M*H, O)    stacked second-layer weights (sum over models via matmul)
    b2_ref : (1, O)      mean over models of second-layer biases
    o_ref  : (tb, O)
    """
    h = jnp.dot(x_ref[...], w1_ref[...], preferred_element_type=jnp.float32)
    h = jnp.maximum(h + b1_ref[...], 0.0)
    out = jnp.dot(h, w2_ref[...], preferred_element_type=jnp.float32)
    # `out` is the sum over models; scale by 1/M and add the mean second bias.
    o_ref[...] = (out * inv_m + b2_ref[...]).astype(o_ref.dtype)


def fuse_ensemble_params(w1, b1, w2, b2):
    """One-time parameter preprocessing (hoisted out of the forward path).

    w1 : (M, I, H), b1 : (M, 1, H), w2 : (M, H, O), b2 : (M, 1, O)
    """
    M, I, H = w1.shape
    O = w2.shape[-1]
    MH = M * H
    w1cat = jnp.transpose(w1, (1, 0, 2)).reshape(I, MH)    # (I, M*H)
    b1cat = b1.reshape(1, MH)                               # (1, M*H)
    w2stk = w2.reshape(MH, O)                               # (M*H, O)
    b2mean = b2.reshape(M, O).mean(axis=0, keepdims=True)   # (1, O)
    inv_m = 1.0 / M
    return w1cat, b1cat, w2stk, b2mean, inv_m


def _choose_batch_tile(B, max_tile=4096):
    """Pick a batch tile: multiple of 8 sublanes, large (cap 4096 rows), and
    aiming for >= 2 grid steps when B is big enough so v7x uses both TCs."""
    tb = _round_up(max(pl.cdiv(B, 2), 8), 8)
    return min(max_tile, tb)


def bagging_ensemble_forward(x, w1cat, b1cat, w2stk, b2mean, inv_m,
                             *, batch_tile=None):
    """
    x      : (B, I) float32
    fused params from `fuse_ensemble_params`.
    returns (B, O) float32 = mean over models of per-model MLP outputs.
    """
    B, I = x.shape
    MH = w1cat.shape[1]
    O = w2stk.shape[1]

    tb = batch_tile if batch_tile is not None else _choose_batch_tile(B)
    tb = max(8, _round_up(tb, 8))
    B_pad = _round_up(B, tb)
    if B_pad != B:
        # Pad with zero rows; they flow through bias+ReLU harmlessly and are
        # sliced off below. Keeps the tiled, pipelined path unconditional.
        x = jnp.pad(x, ((0, B_pad - B), (0, 0)))

    kernel = functools.partial(_fused_ensemble_kernel, inv_m=float(inv_m))

    grid_spec = pltpu.PrefetchScalarGridSpec(
        num_scalar_prefetch=0,
        grid=(B_pad // tb,),
        in_specs=[
            pl.BlockSpec((tb, I), lambda i: (i, 0)),     # x tile
            pl.BlockSpec((I, MH), lambda i: (0, 0)),     # w1cat (resident)
            pl.BlockSpec((1, MH), lambda i: (0, 0)),     # b1cat
            pl.BlockSpec((MH, O), lambda i: (0, 0)),     # w2stk
            pl.BlockSpec((1, O), lambda i: (0, 0)),      # b2mean
        ],
        out_specs=pl.BlockSpec((tb, O), lambda i: (i, 0)),
    )

    out = pl.pallas_call(
        kernel,
        out_shape=jax.ShapeDtypeStruct((B_pad, O), jnp.float32),
        grid_spec=grid_spec,
        compiler_params=pltpu.CompilerParams(
            dimension_semantics=("parallel",),
        ),
    )(x, w1cat, b1cat, w2stk, b2mean)

    if B_pad != B:
        out = out[:B]
    return out


def init_params(key, num_models, input_size, hidden_size, output_size):
    """Deterministic init mimicking nn.Linear's uniform(-1/sqrt(fan_in), +)."""
    ks = jax.random.split(key, 4)
    bound1 = 1.0 / jnp.sqrt(input_size)
    bound2 = 1.0 / jnp.sqrt(hidden_size)
    w1 = jax.random.uniform(ks[0], (num_models, input_size, hidden_size),
                            jnp.float32, -bound1, bound1)
    b1 = jax.random.uniform(ks[1], (num_models, 1, hidden_size),
                            jnp.float32, -bound1, bound1)
    w2 = jax.random.uniform(ks[2], (num_models, hidden_size, output_size),
                            jnp.float32, -bound2, bound2)
    b2 = jax.random.uniform(ks[3], (num_models, 1, output_size),
                            jnp.float32, -bound2, bound2)
    return w1, b1, w2, b2


def reference_forward(x, w1, b1, w2, b2):
    """Pure-JAX reference (per-model, exactly mirroring the PyTorch module)."""
    h = jnp.maximum(jnp.einsum("bi,mih->mbh", x, w1) + b1, 0.0)
    out = jnp.einsum("mbh,mho->mbo", h, w2) + b2
    return out.mean(axis=0)


# TODO(synk): the PyTorch module's fit()/evaluate_model() training loops
# (Adam, DataLoader, bagging resampling) are host-side training code with no
# Pallas equivalent; only the forward pass is implemented here.

if __name__ == "__main__":
    # Small shapes consistent with the module's forward.
    batch, input_size, hidden_size, output_size, num_models = 8, 32, 32, 16, 4

    key = jax.random.PRNGKey(0)
    kx, kp = jax.random.split(key)
    x = jax.random.normal(kx, (batch, input_size), jnp.float32)
    w1, b1, w2, b2 = init_params(kp, num_models, input_size, hidden_size, output_size)

    # One-time fusion of the per-model parameters (hoisted preprocessing).
    w1cat, b1cat, w2stk, b2mean, inv_m = fuse_ensemble_params(w1, b1, w2, b2)

    # Small-batch check (single grid step).
    out = bagging_ensemble_forward(x, w1cat, b1cat, w2stk, b2mean, inv_m)
    out = jax.block_until_ready(out)
    ref = reference_forward(x, w1, b1, w2, b2)
    assert out.shape == (batch, output_size)
    assert jnp.allclose(out, ref, atol=1e-4, rtol=1e-4), "mismatch vs JAX reference"

    # Larger, non-multiple batch exercises padding + multi-step 'parallel' grid.
    big_b = 1000
    xb = jax.random.normal(jax.random.PRNGKey(1), (big_b, input_size), jnp.float32)
    out_b = jax.block_until_ready(
        bagging_ensemble_forward(xb, w1cat, b1cat, w2stk, b2mean, inv_m))
    ref_b = reference_forward(xb, w1, b1, w2, b2)
    assert out_b.shape == (big_b, output_size)
    assert jnp.allclose(out_b, ref_b, atol=1e-4, rtol=1e-4), "mismatch (padded path)"

    print("KERNEL_OK")
</pallas_src>

<mosaic_0001>
module attributes {stable_mosaic.version = 11 : i64} {
  func.func @_fused_ensemble_kernel(%arg0: i32, %arg1: memref<8x32xf32, #tpu.memory_space<vmem>>, %arg2: memref<32x128xf32, #tpu.memory_space<vmem>>, %arg3: memref<1x128xf32, #tpu.memory_space<vmem>>, %arg4: memref<128x16xf32, #tpu.memory_space<vmem>>, %arg5: memref<1x16xf32, #tpu.memory_space<vmem>>, %arg6: memref<8x16xf32, #tpu.memory_space<vmem>>) attributes {dimension_semantics = [#tpu.dimension_semantics<parallel>], iteration_bounds = array<i64: 1>, scalar_prefetch = 0 : i64, scratch_operands = 0 : i64, tpu.core_type = #tpu.core_type<tc>, window_params = [{transform_indices = @transform_0, window_bounds = array<i64: 8, 32>}, {pipeline_mode = #tpu.pipeline_mode<synchronous>, transform_indices = @transform_1, window_bounds = array<i64: 32, 128>}, {pipeline_mode = #tpu.pipeline_mode<synchronous>, transform_indices = @transform_2, window_bounds = array<i64: 1, 128>}, {pipeline_mode = #tpu.pipeline_mode<synchronous>, transform_indices = @transform_3, window_bounds = array<i64: 128, 16>}, {pipeline_mode = #tpu.pipeline_mode<synchronous>, transform_indices = @transform_4, window_bounds = array<i64: 1, 16>}, {transform_indices = @transform_5, window_bounds = array<i64: 8, 16>}]} {
    %c0 = arith.constant 0 : index
    %c0_0 = arith.constant 0 : index
    %0 = vector.load %arg1[%c0, %c0_0] : memref<8x32xf32, #tpu.memory_space<vmem>>, vector<8x32xf32>
    %c0_1 = arith.constant 0 : index
    %c0_2 = arith.constant 0 : index
    %1 = vector.load %arg2[%c0_1, %c0_2] : memref<32x128xf32, #tpu.memory_space<vmem>>, vector<32x128xf32>
    %cst = arith.constant dense<0.000000e+00> : vector<8x128xf32>
    %2 = tpu.matmul %0, %1, %cst {dimension_numbers = #tpu.dot_dimension_numbers<[1], [0], [0], [1], [0, 0, 1, 1], [], []>} : vector<8x32xf32>, vector<32x128xf32>, vector<8x128xf32> -> vector<8x128xf32>
    %c0_3 = arith.constant 0 : index
    %c0_4 = arith.constant 0 : index
    %3 = vector.load %arg3[%c0_3, %c0_4] : memref<1x128xf32, #tpu.memory_space<vmem>>, vector<1x128xf32>
    %4 = vector.broadcast %3 : vector<1x128xf32> to vector<8x128xf32>
    %5 = arith.addf %2, %4 : vector<8x128xf32>
    %cst_5 = arith.constant 0.000000e+00 : f32
    %6 = vector.broadcast %cst_5 : f32 to vector<8x128xf32>
    %7 = arith.maximumf %5, %6 : vector<8x128xf32>
    %c0_6 = arith.constant 0 : index
    %c0_7 = arith.constant 0 : index
    %8 = vector.load %arg4[%c0_6, %c0_7] : memref<128x16xf32, #tpu.memory_space<vmem>>, vector<128x16xf32>
    %cst_8 = arith.constant dense<0.000000e+00> : vector<8x16xf32>
    %9 = tpu.matmul %7, %8, %cst_8 {dimension_numbers = #tpu.dot_dimension_numbers<[1], [0], [0], [1], [0, 0, 1, 1], [], []>} : vector<8x128xf32>, vector<128x16xf32>, vector<8x16xf32> -> vector<8x16xf32>
    %cst_9 = arith.constant 2.500000e-01 : f32
    %10 = vector.broadcast %cst_9 : f32 to vector<8x16xf32>
    %11 = arith.mulf %9, %10 : vector<8x16xf32>
    %c0_10 = arith.constant 0 : index
    %c0_11 = arith.constant 0 : index
    %12 = vector.load %arg5[%c0_10, %c0_11] : memref<1x16xf32, #tpu.memory_space<vmem>>, vector<1x16xf32>
    %13 = vector.broadcast %12 : vector<1x16xf32> to vector<8x16xf32>
    %14 = arith.addf %11, %13 : vector<8x16xf32>
    %c0_12 = arith.constant 0 : index
    %c0_13 = arith.constant 0 : index
    %15 = vector.load %arg6[%c0_12, %c0_13] : memref<8x16xf32, #tpu.memory_space<vmem>>, vector<8x16xf32>
    tpu.vector_store %arg6[%c0_12, %c0_13], %14 {strides = array<i32>} : memref<8x16xf32, #tpu.memory_space<vmem>>, vector<8x16xf32>,
    return
  }
  func.func @transform_0(%arg0: i32) -> (i32, i32) {
    %c0_i32 = arith.constant 0 : i32
    %c0_i32_0 = arith.constant 0 : i32
    return %arg0, %c0_i32 : i32, i32
  }
  func.func @transform_1(%arg0: i32) -> (i32, i32) {
    %c0_i32 = arith.constant 0 : i32
    %c0_i32_0 = arith.constant 0 : i32
    %c0_i32_1 = arith.constant 0 : i32
    return %c0_i32, %c0_i32_0 : i32, i32
  }
  func.func @transform_2(%arg0: i32) -> (i32, i32) {
    %c0_i32 = arith.constant 0 : i32
    %c0_i32_0 = arith.constant 0 : i32
    %c0_i32_1 = arith.constant 0 : i32
    return %c0_i32, %c0_i32_0 : i32, i32
  }
  func.func @transform_3(%arg0: i32) -> (i32, i32) {
    %c0_i32 = arith.constant 0 : i32
    %c0_i32_0 = arith.constant 0 : i32
    %c0_i32_1 = arith.constant 0 : i32
    return %c0_i32, %c0_i32_0 : i32, i32
  }
  func.func @transform_4(%arg0: i32) -> (i32, i32) {
    %c0_i32 = arith.constant 0 : i32
    %c0_i32_0 = arith.constant 0 : i32
    %c0_i32_1 = arith.constant 0 : i32
    return %c0_i32, %c0_i32_0 : i32, i32
  }
  func.func @transform_5(%arg0: i32) -> (i32, i32) {
    %c0_i32 = arith.constant 0 : i32
    %c0_i32_0 = arith.constant 0 : i32
    return %arg0, %c0_i32 : i32, i32
  }
}

</mosaic_0001>

<llo_original>
// kernel: tpu_custom_call.1
$region0: #{tpu_custom_call.1}
  #allocation0 [shape = 'u32[]', space=smem, size = 0x4, offset = 0x4, fixed_abs, tag = 'smem constant byte address 0x4 - core index']
  #allocation1 [shape = 'u32[144,128]{1,0:T(1,128)}', space=vmem, size = 0x12000, scoped, tag = 'internal scratch']
  %s0 = inlined_call_operand.vmem [shape: f32[8,32], index: 0, kind: input, shape index: {}]
  %s1 = inlined_call_operand.vmem [shape: f32[32,128], index: 1, kind: input, shape index: {}]
  %s2 = inlined_call_operand.vmem [shape: f32[1,128], index: 2, kind: input, shape index: {}]
  %s3 = inlined_call_operand.vmem [shape: f32[128,16], index: 3, kind: input, shape index: {}]
  %s4 = inlined_call_operand.vmem [shape: f32[1,16], index: 4, kind: input, shape index: {}]
  %s5 = inlined_call_operand.hbm [shape: f32[8,16], index: 5, kind: output, shape index: {}]
  %s6 = sld [smem:[#allocation0]]
  $region30: #{tpu_custom_call.1} parent=0
    _
  %s8 = ssub.s32 1, %s6
  %s9 = scalar_select 0, %s8, %s6
  $region1: #{tpu_custom_call.1} parent=0
    #allocation2 [shape = 'u8[4096]{0}', space=vmem, size = 0x1000, scoped, tag = 'output window, operand 0, single buffered']
    #allocation3 [shape = 's32[1]{0}', space=sflag, size = 0x4, scoped, tag = 'scoped memory for tpu_custom_call.1']
    %10 = vsyncpa [#allocation3], 0
    // Predicated region
    $region2: #{tpu_custom_call.1} parent=1 // pred_check
      _
    $region3: #{tpu_custom_call.1} parent=1 // pred_check_branch
      %12 = sbr.rel (0) target = $region5
    $region4: #{tpu_custom_call.1} parent=1 // pred_region
      _
    $region5: #{tpu_custom_call.1} parent=1 // pred_fallthru
      _
    // Predicated region
    $region6: #{tpu_custom_call.1} parent=1 // pred_check
      _
    $region7: #{tpu_custom_call.1} parent=1 // pred_check_branch
      %14 = sbr.rel (0) target = $region9
    $region8: #{tpu_custom_call.1} parent=1 // pred_region
      _
    $region9: #{tpu_custom_call.1} parent=1 // pred_fallthru
      _
    // Predicated region
    $region10: #{tpu_custom_call.1} parent=1 // pred_check
      _
    $region11: #{tpu_custom_call.1} parent=1 // pred_check_branch
      %16 = sbr.rel (0) target = $region13
    $region12: #{tpu_custom_call.1} parent=1 // pred_region
      _
    $region13: #{tpu_custom_call.1} parent=1 // pred_fallthru
      _
    // Predicated region
    $region14: #{tpu_custom_call.1} parent=1 // pred_check
      _
    $region15: #{tpu_custom_call.1} parent=1 // pred_check_branch
      %18 = sbr.rel (0) target = $region17
    $region16: #{tpu_custom_call.1} parent=1 // pred_region
      _
    $region17: #{tpu_custom_call.1} parent=1 // pred_fallthru
      _
    // Predicated region
    $region18: #{tpu_custom_call.1} parent=1 // pred_check
      _
    $region19: #{tpu_custom_call.1} parent=1 // pred_check_branch
      %20 = sbr.rel (0) target = $region21
    $region20: #{tpu_custom_call.1} parent=1 // pred_region
      _
    $region21: #{tpu_custom_call.1} parent=1 // pred_fallthru
      _
    %v21 = vld [vmem:[%s0] sm:$0xff]
    %v22 = vld [vmem:[%s1] sm:$0xff]
    %v23 = vld [vmem:[%s1 + $0x8] sm:$0xff]
    %v24 = vld [vmem:[%s1 + $0x10] sm:$0xff]
    %v25 = vld [vmem:[%s1 + $0x18] sm:$0xff]
    %v26 = vld [vmem:[%s2] sm:$0x1]
    %v28 = vlaneseq
    %v29 = vshrl.u32 %v28, 7
    %v30 = vsub.s32 0, %v29
    %v31 = vrot.slane %v26, %v30
    %vm33 = vcmask 261120
    %v35 = vsel %vm33, %v21, 0
    %37 = vmatprep.subr.mxu0 0.0
    %38 = vmatpush1.msra.mxu0 0.0
    %39 = vmatprep.subr.mxu0 0.0
    %40 = vmatpush1.msra.mxu0 0.0
    %41 = vmatprep.subr.mxu0 0.0
    %42 = vmatpush1.msra.mxu0 0.0
    %43 = vmatprep.subr.mxu0 0.0
    %44 = vmatpush1.msra.mxu0 0.0
    %45 = vmatprep.subr.mxu0 0.0
    %46 = vmatpush1.msra.mxu0 0.0
    %47 = vmatprep.subr.mxu0 0.0
    %48 = vmatpush1.msra.mxu0 0.0
    %49 = vmatprep.subr.mxu0 0.0
    %50 = vmatpush1.msra.mxu0 0.0
    %51 = vmatprep.subr.mxu0 0.0
    %52 = vmatpush1.msra.mxu0 0.0
    %53 = vmatprep.subr.mxu0 0.0
    %54 = vmatpush1.msra.mxu0 0.0
    %55 = vmatprep.subr.mxu0 0.0
    %56 = vmatpush1.msra.mxu0 0.0
    %57 = vmatprep.subr.mxu0 0.0
    %58 = vmatpush1.msra.mxu0 0.0
    %59 = vmatprep.subr.mxu0 0.0
    %60 = vmatpush1.msra.mxu0 0.0
    %61 = vmatprep.subr.mxu0 0.0
    %62 = vmatpush1.msra.mxu0 %v25
    %63 = vmatprep.subr.mxu0 0.0
    %64 = vmatpush1.msra.mxu0 %v24
    %65 = vmatprep.subr.mxu0 0.0
    %66 = vmatpush1.msra.mxu0 %v23
    %67 = vmatprep.subr.mxu0 0.0
    %68 = vmatpush1.msra.mxu0 %v22
    %69 = vmatprep.subr.mxu0 0.0
    %70 = vmatpush2.msra.mxu0 0.0
    %71 = vmatprep.subr.mxu0 0.0
    %72 = vmatpush2.msra.mxu0 0.0
    %73 = vmatprep.subr.mxu0 0.0
    %74 = vmatpush2.msra.mxu0 0.0
    %75 = vmatprep.subr.mxu0 0.0
    %76 = vmatpush2.msra.mxu0 0.0
    %77 = vmatprep.subr.mxu0 0.0
    %78 = vmatpush2.msra.mxu0 0.0
    %79 = vmatprep.subr.mxu0 0.0
    %80 = vmatpush2.msra.mxu0 0.0
    %81 = vmatprep.subr.mxu0 0.0
    %82 = vmatpush2.msra.mxu0 0.0
    %83 = vmatprep.subr.mxu0 0.0
    %84 = vmatpush2.msra.mxu0 0.0
    %85 = vmatprep.subr.mxu0 0.0
    %86 = vmatpush2.msra.mxu0 0.0
    %87 = vmatprep.subr.mxu0 0.0
    %88 = vmatpush2.msra.mxu0 0.0
    %89 = vmatprep.subr.mxu0 0.0
    %90 = vmatpush2.msra.mxu0 0.0
    %91 = vmatprep.subr.mxu0 0.0
    %92 = vmatpush2.msra.mxu0 0.0
    %93 = vmatprep.subr.mxu0 0.0
    %94 = vmatpush2.msra.mxu0 0.0
    %95 = vmatprep.subr.mxu0 0.0
    %96 = vmatpush2.msra.mxu0 0.0
    %97 = vmatprep.subr.mxu0 0.0
    %98 = vmatpush2.msra.mxu0 0.0
    %99 = vmatprep.subr.mxu0 0.0
    %100 = vmatpush2.msra.mxu0 0.0
    %101 = vmatprep.mubr.f32.mxu0 0.0
    %102 = vmatmul.mubr.f32.gmra.mxu0 %v35
    %v103 = vpop.f32.mrf.mxu0
    %v104 = vadd.f32 %v31, %v103
    %v105 = vpop.f32.mrf.mxu0
    %106 = vdwg.mxu0
    %v107 = vmax.f32 %v104, 0.0
    %v108 = vld [vmem:[%s3] sm:$0xff]
    %v109 = vld [vmem:[%s3 + $0x8] sm:$0xff]
    %v110 = vld [vmem:[%s3 + $0x10] sm:$0xff]
    %v111 = vld [vmem:[%s3 + $0x18] sm:$0xff]
    %v112 = vld [vmem:[%s3 + $0x20] sm:$0xff]
    %v113 = vld [vmem:[%s3 + $0x28] sm:$0xff]
    %v114 = vld [vmem:[%s3 + $0x30] sm:$0xff]
    %v115 = vld [vmem:[%s3 + $0x38] sm:$0xff]
    %v116 = vld [vmem:[%s3 + $0x40] sm:$0xff]
    %v117 = vld [vmem:[%s3 + $0x48] sm:$0xff]
    %v118 = vld [vmem:[%s3 + $0x50] sm:$0xff]
    %v119 = vld [vmem:[%s3 + $0x58] sm:$0xff]
    %v120 = vld [vmem:[%s3 + $0x60] sm:$0xff]
    %v121 = vld [vmem:[%s3 + $0x68] sm:$0xff]
    %v122 = vld [vmem:[%s3 + $0x70] sm:$0xff]
    %v123 = vld [vmem:[%s3 + $0x78] sm:$0xff]
    %124 = vmatprep.subr.mxu0 0.0
    %125 = vmatpush1.msra.mxu0 %v123
    %126 = vmatprep.subr.mxu0 0.0
    %127 = vmatpush1.msra.mxu0 %v122
    %128 = vmatprep.subr.mxu0 0.0
    %129 = vmatpush1.msra.mxu0 %v121
    %130 = vmatprep.subr.mxu0 0.0
    %131 = vmatpush1.msra.mxu0 %v120
    %132 = vmatprep.subr.mxu0 0.0
    %133 = vmatpush1.msra.mxu0 %v119
    %134 = vmatprep.subr.mxu0 0.0
    %135 = vmatpush1.msra.mxu0 %v118
    %136 = vmatprep.subr.mxu0 0.0
    %137 = vmatpush1.msra.mxu0 %v117
    %138 = vmatprep.subr.mxu0 0.0
    %139 = vmatpush1.msra.mxu0 %v116
    %140 = vmatprep.subr.mxu0 0.0
    %141 = vmatpush1.msra.mxu0 %v115
    %142 = vmatprep.subr.mxu0 0.0
    %143 = vmatpush1.msra.mxu0 %v114
    %144 = vmatprep.subr.mxu0 0.0
    %145 = vmatpush1.msra.mxu0 %v113
    %146 = vmatprep.subr.mxu0 0.0
    %147 = vmatpush1.msra.mxu0 %v112
    %148 = vmatprep.subr.mxu0 0.0
    %149 = vmatpush1.msra.mxu0 %v111
    %150 = vmatprep.subr.mxu0 0.0
    %151 = vmatpush1.msra.mxu0 %v110
    %152 = vmatprep.subr.mxu0 0.0
    %153 = vmatpush1.msra.mxu0 %v109
    %154 = vmatprep.subr.mxu0 0.0
    %155 = vmatpush1.msra.mxu0 %v108
    %156 = vmatprep.subr.mxu0 0.0
    %157 = vmatpush2.msra.mxu0 0.0
    %158 = vmatprep.subr.mxu0 0.0
    %159 = vmatpush2.msra.mxu0 0.0
    %160 = vmatprep.subr.mxu0 0.0
    %161 = vmatpush2.msra.mxu0 0.0
    %162 = vmatprep.subr.mxu0 0.0
    %163 = vmatpush2.msra.mxu0 0.0
    %164 = vmatprep.subr.mxu0 0.0
    %165 = vmatpush2.msra.mxu0 0.0
    %166 = vmatprep.subr.mxu0 0.0
    %167 = vmatpush2.msra.mxu0 0.0
    %168 = vmatprep.subr.mxu0 0.0
    %169 = vmatpush2.msra.mxu0 0.0
    %170 = vmatprep.subr.mxu0 0.0
    %171 = vmatpush2.msra.mxu0 0.0
    %172 = vmatprep.subr.mxu0 0.0
    %173 = vmatpush2.msra.mxu0 0.0
    %174 = vmatprep.subr.mxu0 0.0
    %175 = vmatpush2.msra.mxu0 0.0
    %176 = vmatprep.subr.mxu0 0.0
    %177 = vmatpush2.msra.mxu0 0.0
    %178 = vmatprep.subr.mxu0 0.0
    %179 = vmatpush2.msra.mxu0 0.0
    %180 = vmatprep.subr.mxu0 0.0
    %181 = vmatpush2.msra.mxu0 0.0
    %182 = vmatprep.subr.mxu0 0.0
    %183 = vmatpush2.msra.mxu0 0.0
    %184 = vmatprep.subr.mxu0 0.0
    %185 = vmatpush2.msra.mxu0 0.0
    %186 = vmatprep.subr.mxu0 0.0
    %187 = vmatpush2.msra.mxu0 0.0
    %188 = vmatprep.mubr.f32.mxu0 0.0
    %189 = vmatmul.mubr.f32.gmra.mxu0 %v107
    %v190 = vpop.f32.mrf.mxu0
    %v191 = vadd.f32 0.0, %v190
    %v192 = vpop.f32.mrf.mxu0
    %193 = vdwg.mxu0
    %v194 = vmul.f32 %v191, 0.25
    %v195 = vld [vmem:[%s4] sm:$0x1]
    %v197 = vlaneseq
    %v198 = vshrl.u32 %v197, 7
    %v199 = vsub.s32 0, %v198
    %v200 = vrot.slane %v195, %v199
    %v202 = vadd.f32 %v194, %v200
    %vm203 = vcmask 130048
    %204 = vst.msk [vmem:[#allocation2] sm:$0xff] %vm203, %v202
    // Predicated region
    $region22: #{tpu_custom_call.1} parent=1 // pred_check
      _
    $region23: #{tpu_custom_call.1} parent=1 // pred_check_branch
      %206 = sbr.rel (0) target = $region25
    $region24: #{tpu_custom_call.1} parent=1 // pred_region
      %s208 = ssub.s32 128, 128
      %209 = vsyncadd [#allocation3], %s208
      %s211 = sshll.u32 [#allocation2], 4
      %s212 = int_to_ptr.vmem [resolvable:$true] %s211
      %214 = dma.vmem_to_hbm [thread:$0]  %s212, 128, %s5, [#allocation3]
    $region25: #{tpu_custom_call.1} parent=1 // pred_fallthru
      _
    // Predicated region
    $region26: #{tpu_custom_call.1} parent=1 // pred_check
      _
    $region27: #{tpu_custom_call.1} parent=1 // pred_check_branch
      %216 = sbr.rel (0) target = $region29
    $region28: #{tpu_custom_call.1} parent=1 // pred_region
      %217 = dma.done [#allocation3], 128
    $region29: #{tpu_custom_call.1} parent=1 // pred_fallthru
      _
    %218 = vsyncpa [#allocation3], 1

</llo_original>
